<compile_context>
chip_gen: v5e
topology: v5e:2x2
jax: 0.10.0
libtpu: 0.0.40
codegen_flags: <defaults>
</compile_context>

<pallas_src>
import functools
import math

import jax
import jax.numpy as jnp
from jax import lax
from jax.experimental import pallas as pl
from jax.experimental.pallas import tpu as pltpu


def _cdiv(a, b):
    return -(-a // b)


def _round_up(x, m):
    return (x + m - 1) // m * m


def _dice_kernel(p_ref, t_ref, num_ref, den_ref, num_acc, den_acc, *,
                 n_chunks, nk_total, nk_split, td, d, p_pow, ragged,
                 has_invalid):
    s = pl.program_id(0)                 # D-split index ("parallel")
    k = pl.program_id(2)                 # reduction step within this split
    kg = s * nk_split + k                # global D-block index

    @pl.when(k == 0)
    def _init():
        num_acc[...] = jnp.zeros_like(num_acc)
        den_acc[...] = jnp.zeros_like(den_acc)

    if p_pow == 1:
        powf = lambda x: x
    elif p_pow == 2:
        powf = lambda x: x * x
    elif float(p_pow).is_integer():
        powf = lambda x: lax.integer_pow(x, int(p_pow))   # stays off the EUP
    else:
        powf = lambda x: x ** p_pow

    acc_shape = num_acc.shape            # (tn, 128) per-lane partials

    def _accumulate(masked):
        if masked:
            lane = lax.broadcasted_iota(jnp.int32, acc_shape, 1)
            base = kg * td               # first global column of this block

        def chunk(c, num_p, den_p):
            # 128-lane column slab straight from the VMEM block buffer;
            # cast to f32 per slab (no giant materialized temporaries).
            if isinstance(c, int):
                off = c * 128
            else:
                off = pl.multiple_of(c * 128, 128)
            pc = p_ref[:, pl.ds(off, 128)].astype(jnp.float32)
            tc = t_ref[:, pl.ds(off, 128)].astype(jnp.float32)
            if masked:
                m = (base + c * 128 + lane) < d
                pc = jnp.where(m, pc, 0.0)
                tc = jnp.where(m, tc, 0.0)
            return num_p + pc * tc, den_p + (powf(pc) + powf(tc))

        zeros = jnp.zeros(acc_shape, jnp.float32)
        if n_chunks <= 16:
            num_p, den_p = zeros, zeros
            for c in range(n_chunks):                       # fully unrolled
                num_p, den_p = chunk(c, num_p, den_p)
        else:
            num_p, den_p = lax.fori_loop(
                0, n_chunks, lambda c, carry: chunk(c, *carry),
                (zeros, zeros), unroll=8)
        num_acc[...] += num_p
        den_acc[...] += den_p

    if ragged:
        # Hot path: full blocks, zero masking overhead.
        @pl.when(kg < nk_total - 1)
        def _full_blocks():
            _accumulate(False)

        # Last global D-block: mask columns >= d (also skips over-run steps).
        @pl.when(kg == nk_total - 1)
        def _tail_block():
            _accumulate(True)
    elif has_invalid:
        @pl.when(kg < nk_total)
        def _valid_blocks():
            _accumulate(False)
    else:
        _accumulate(False)

    @pl.when(k == nk_split - 1)
    def _finalize():
        # Single cross-lane (XLU) reduce per (split, N-block).
        num_ref[...] = jnp.sum(num_acc[...], axis=1, keepdims=True)[None]
        den_ref[...] = jnp.sum(den_acc[...], axis=1, keepdims=True)[None]


def _reduce(loss, reduction):
    if reduction == "mean":
        return jnp.mean(loss)
    elif reduction == "sum":
        return jnp.sum(loss)
    elif reduction == "none":
        return loss
    raise ValueError(f"Unexpected reduction {reduction}")


def binary_dice_loss(predict, target, smooth=1.0, p=2, reduction="mean",
                     max_tile_elems=None):
    assert predict.shape[0] == target.shape[0], \
        "predict & target batch size don't match"

    n = predict.shape[0]
    d = math.prod(predict.shape[1:])
    d_t = math.prod(target.shape[1:])
    assert d == d_t, "predict & target flattened sizes don't match"

    if d == 0:
        return _reduce(jnp.zeros((n,), jnp.float32), reduction)

    def _as2d(x):
        x2 = x.reshape(n, d)                       # free view for contiguous input
        if x2.dtype == jnp.bool_:
            x2 = x2.astype(jnp.int8)               # only copies for bool masks
        return x2

    pred2 = _as2d(predict)
    targ2 = _as2d(target)
    isz_p = jnp.dtype(pred2.dtype).itemsize
    isz_t = jnp.dtype(targ2.dtype).itemsize

    # ---- Tile selection: ~8 MiB per step, N tiled to bound VMEM -------------
    tn = n if n <= 64 else 64                      # multiple of 32 when tiled
    target_step_bytes = 8 << 20
    td = (target_step_bytes // (tn * (isz_p + isz_t))) // 128 * 128
    td = max(128, min(td, _round_up(d, 128)))
    if max_tile_elems is not None:                 # testing hook
        td = max(128, min(td, int(max_tile_elems) // 128 * 128))

    ni = _cdiv(n, tn)
    nk_total = _cdiv(d, td)
    ragged = (d % td) != 0

    # When a single N-block exists, split D across two "parallel" halves so
    # both v7x TensorCores get work (no-op overhead on v5e/v6e).
    n_splits = 2 if (ni == 1 and nk_total >= 2) else 1
    nk_split = _cdiv(nk_total, n_splits)
    has_invalid = (n_splits * nk_split) != nk_total

    try:
        vmem_cap = int(pltpu.get_tpu_info().vmem_capacity_bytes)
    except Exception:
        vmem_cap = 64 << 20                        # conservative: v7x 64 MiB/TC

    step_in_bytes = tn * td * (isz_p + isz_t)
    needed = 2 * step_in_bytes + 2 * tn * 128 * 4 + (4 << 20)
    vmem_limit = min(int(vmem_cap * 0.9), max(needed, 32 << 20))

    kernel = functools.partial(
        _dice_kernel,
        n_chunks=td // 128, nk_total=nk_total, nk_split=nk_split,
        td=td, d=d, p_pow=p, ragged=ragged, has_invalid=has_invalid)

    in_map = lambda s, i, k: (i, jnp.minimum(s * nk_split + k, nk_total - 1))
    out_map = lambda s, i, k: (s, i, 0)

    num_parts, den_parts = pl.pallas_call(
        kernel,
        out_shape=(jax.ShapeDtypeStruct((n_splits, n, 1), jnp.float32),
                   jax.ShapeDtypeStruct((n_splits, n, 1), jnp.float32)),
        grid_spec=pltpu.PrefetchScalarGridSpec(
            num_scalar_prefetch=0,
            grid=(n_splits, ni, nk_split),
            in_specs=[pl.BlockSpec((tn, td), in_map),
                      pl.BlockSpec((tn, td), in_map)],
            out_specs=[pl.BlockSpec((1, tn, 1), out_map),
                       pl.BlockSpec((1, tn, 1), out_map)],
            scratch_shapes=[pltpu.VMEM((tn, 128), jnp.float32),   # num partials
                            pltpu.VMEM((tn, 128), jnp.float32)],  # den partials
        ),
        compiler_params=pltpu.CompilerParams(
            dimension_semantics=("parallel", "parallel", "arbitrary"),
            vmem_limit_bytes=vmem_limit,
        ),
        cost_estimate=pl.CostEstimate(
            flops=5 * n * d,
            transcendentals=0,
            bytes_accessed=n * d * (isz_p + isz_t) + n_splits * n * 8),
    )(pred2, targ2)

    # Combine split partials, add smooth, finish per-row loss in plain JAX.
    num = jnp.sum(num_parts[:, :, 0], axis=0) + smooth
    den = jnp.sum(den_parts[:, :, 0], axis=0) + smooth
    loss = 1.0 - num / den
    return _reduce(loss, reduction)


def _reference(predict, target, smooth=1.0, p=2, reduction="mean"):
    n = predict.shape[0]
    pr = predict.reshape(n, -1).astype(jnp.float32)
    tg = target.reshape(n, -1).astype(jnp.float32)
    num = jnp.sum(pr * tg, axis=1) + smooth
    den = jnp.sum(pr ** p + tg ** p, axis=1) + smooth
    return _reduce(1.0 - num / den, reduction)


if __name__ == "__main__":
    key = jax.random.PRNGKey(0)
    k1, k2 = jax.random.split(key)

    # 1) Module-style NCHW f32 inputs (sigmoid probs + binary mask), one step.
    x1 = (2, 4, 16, 16)
    p1 = jax.nn.sigmoid(jax.random.normal(k1, x1, dtype=jnp.float32))
    t1 = (jax.random.uniform(k2, x1, dtype=jnp.float32) > 0.5).astype(jnp.float32)
    l1 = jax.block_until_ready(binary_dice_loss(p1, t1))
    assert jnp.allclose(l1, _reference(p1, t1), rtol=1e-5, atol=1e-6), l1

    # 2) Native bf16 predict, small forced tiles: multi-step reduction axis,
    #    2-way parallel D split with an odd block count (clamped index map +
    #    skip guard path).
    x2 = (2, 3, 32, 32)                            # D = 3072 -> 3 blocks of 1024
    p2 = jax.nn.sigmoid(jax.random.normal(k1, x2, dtype=jnp.float32)).astype(jnp.bfloat16)
    t2 = (jax.random.uniform(k2, x2, dtype=jnp.float32) > 0.5).astype(jnp.float32)
    l2 = jax.block_until_ready(binary_dice_loss(p2, t2, max_tile_elems=1024))
    assert jnp.allclose(l2, _reference(p2, t2), rtol=1e-4, atol=1e-5), l2

    # 3) Non-128-aligned D: ragged tail handled by in-kernel masking (no pad).
    x3 = (3, 3, 7, 11)                             # D = 231
    p3 = jax.nn.sigmoid(jax.random.normal(k1, x3, dtype=jnp.float32))
    t3 = (jax.random.uniform(k2, x3, dtype=jnp.float32) > 0.5).astype(jnp.float32)
    l3 = jax.block_until_ready(binary_dice_loss(p3, t3))
    assert jnp.allclose(l3, _reference(p3, t3), rtol=1e-5, atol=1e-6), l3

    # 4) Batch-tiled path: grid over N with a partial last row block, 'none'.
    x4 = (70, 5, 9, 7)                             # N = 70 (> tn=64), D = 315
    p4 = jax.nn.sigmoid(jax.random.normal(k1, x4, dtype=jnp.float32))
    t4 = (jax.random.uniform(k2, x4, dtype=jnp.float32) > 0.5).astype(jnp.float32)
    l4 = jax.block_until_ready(binary_dice_loss(p4, t4, reduction="none"))
    assert jnp.allclose(l4, _reference(p4, t4, reduction="none"),
                        rtol=1e-5, atol=1e-6), l4

    # 5) Large D in a single block: exercises the in-kernel fori_loop walker.
    x5 = (2, 2, 64, 64)                            # D = 8192 -> 64 lane chunks
    p5 = jax.nn.sigmoid(jax.random.normal(k1, x5, dtype=jnp.float32)).astype(jnp.bfloat16)
    t5 = (jax.random.uniform(k2, x5, dtype=jnp.float32) > 0.5).astype(jnp.float32)
    l5 = jax.block_until_ready(binary_dice_loss(p5, t5))
    assert jnp.allclose(l5, _reference(p5, t5), rtol=1e-4, atol=1e-5), l5

    print("KERNEL_OK")
</pallas_src>

<mosaic_0001>
module attributes {stable_mosaic.version = 11 : i64} {
  func.func @_dice_kernel(%arg0: i32, %arg1: i32, %arg2: i32, %arg3: memref<2x1024xf32, #tpu.memory_space<vmem>>, %arg4: memref<2x1024xf32, #tpu.memory_space<vmem>>, %arg5: memref<1x2x1xf32, #tpu.memory_space<vmem>>, %arg6: memref<1x2x1xf32, #tpu.memory_space<vmem>>, %arg7: memref<2x128xf32, #tpu.memory_space<vmem>>, %arg8: memref<2x128xf32, #tpu.memory_space<vmem>>) attributes {dimension_semantics = [#tpu.dimension_semantics<parallel>, #tpu.dimension_semantics<parallel>, #tpu.dimension_semantics<arbitrary>], iteration_bounds = array<i64: 1, 1, 1>, scalar_prefetch = 0 : i64, scratch_operands = 2 : i64, tpu.core_type = #tpu.core_type<tc>, window_params = [{transform_indices = @transform_0, window_bounds = array<i64: 2, 1024>}, {transform_indices = @transform_1, window_bounds = array<i64: 2, 1024>}, {transform_indices = @transform_2, window_bounds = array<i64: 1, 2, 1>}, {transform_indices = @transform_3, window_bounds = array<i64: 1, 2, 1>}]} {
    %c0_i32 = arith.constant 0 : i32
    %0 = arith.cmpi eq, %arg2, %c0_i32 : i32
    %1 = arith.extui %0 : i1 to i32
    %c0_i32_0 = arith.constant 0 : i32
    %2 = arith.cmpi ne, %1, %c0_i32_0 : i32
    scf.if %2 {
      %cst_35 = arith.constant 0.000000e+00 : f32
      %77 = vector.broadcast %cst_35 : f32 to vector<2x128xf32>
      %c0_36 = arith.constant 0 : index
      %c0_37 = arith.constant 0 : index
      %78 = vector.load %arg7[%c0_36, %c0_37] : memref<2x128xf32, #tpu.memory_space<vmem>>, vector<2x128xf32>
      tpu.vector_store %arg7[%c0_36, %c0_37], %77 {strides = array<i32>} : memref<2x128xf32, #tpu.memory_space<vmem>>, vector<2x128xf32>,
      %cst_38 = arith.constant 0.000000e+00 : f32
      %79 = vector.broadcast %cst_38 : f32 to vector<2x128xf32>
      %c0_39 = arith.constant 0 : index
      %c0_40 = arith.constant 0 : index
      %80 = vector.load %arg8[%c0_39, %c0_40] : memref<2x128xf32, #tpu.memory_space<vmem>>, vector<2x128xf32>
      tpu.vector_store %arg8[%c0_39, %c0_40], %79 {strides = array<i32>} : memref<2x128xf32, #tpu.memory_space<vmem>>, vector<2x128xf32>,
    } else {
    }
    %cst = arith.constant 0.000000e+00 : f32
    %3 = vector.broadcast %cst : f32 to vector<2x128xf32>
    %c0 = arith.constant 0 : index
    %c0_1 = arith.constant 0 : index
    %4 = vector.load %arg3[%c0, %c0_1] : memref<2x1024xf32, #tpu.memory_space<vmem>>, vector<2x128xf32>
    %c0_2 = arith.constant 0 : index
    %c0_3 = arith.constant 0 : index
    %5 = vector.load %arg4[%c0_2, %c0_3] : memref<2x1024xf32, #tpu.memory_space<vmem>>, vector<2x128xf32>
    %6 = arith.mulf %4, %5 : vector<2x128xf32>
    %7 = arith.addf %3, %6 : vector<2x128xf32>
    %8 = arith.mulf %4, %4 : vector<2x128xf32>
    %9 = arith.mulf %5, %5 : vector<2x128xf32>
    %10 = arith.addf %8, %9 : vector<2x128xf32>
    %11 = arith.addf %3, %10 : vector<2x128xf32>
    %c0_4 = arith.constant 0 : index
    %c128 = arith.constant 128 : index
    %12 = vector.load %arg3[%c0_4, %c128] : memref<2x1024xf32, #tpu.memory_space<vmem>>, vector<2x128xf32>
    %c0_5 = arith.constant 0 : index
    %c128_6 = arith.constant 128 : index
    %13 = vector.load %arg4[%c0_5, %c128_6] : memref<2x1024xf32, #tpu.memory_space<vmem>>, vector<2x128xf32>
    %14 = arith.mulf %12, %13 : vector<2x128xf32>
    %15 = arith.addf %7, %14 : vector<2x128xf32>
    %16 = arith.mulf %12, %12 : vector<2x128xf32>
    %17 = arith.mulf %13, %13 : vector<2x128xf32>
    %18 = arith.addf %16, %17 : vector<2x128xf32>
    %19 = arith.addf %11, %18 : vector<2x128xf32>
    %c0_7 = arith.constant 0 : index
    %c256 = arith.constant 256 : index
    %20 = vector.load %arg3[%c0_7, %c256] : memref<2x1024xf32, #tpu.memory_space<vmem>>, vector<2x128xf32>
    %c0_8 = arith.constant 0 : index
    %c256_9 = arith.constant 256 : index
    %21 = vector.load %arg4[%c0_8, %c256_9] : memref<2x1024xf32, #tpu.memory_space<vmem>>, vector<2x128xf32>
    %22 = arith.mulf %20, %21 : vector<2x128xf32>
    %23 = arith.addf %15, %22 : vector<2x128xf32>
    %24 = arith.mulf %20, %20 : vector<2x128xf32>
    %25 = arith.mulf %21, %21 : vector<2x128xf32>
    %26 = arith.addf %24, %25 : vector<2x128xf32>
    %27 = arith.addf %19, %26 : vector<2x128xf32>
    %c0_10 = arith.constant 0 : index
    %c384 = arith.constant 384 : index
    %28 = vector.load %arg3[%c0_10, %c384] : memref<2x1024xf32, #tpu.memory_space<vmem>>, vector<2x128xf32>
    %c0_11 = arith.constant 0 : index
    %c384_12 = arith.constant 384 : index
    %29 = vector.load %arg4[%c0_11, %c384_12] : memref<2x1024xf32, #tpu.memory_space<vmem>>, vector<2x128xf32>
    %30 = arith.mulf %28, %29 : vector<2x128xf32>
    %31 = arith.addf %23, %30 : vector<2x128xf32>
    %32 = arith.mulf %28, %28 : vector<2x128xf32>
    %33 = arith.mulf %29, %29 : vector<2x128xf32>
    %34 = arith.addf %32, %33 : vector<2x128xf32>
    %35 = arith.addf %27, %34 : vector<2x128xf32>
    %c0_13 = arith.constant 0 : index
    %c512 = arith.constant 512 : index
    %36 = vector.load %arg3[%c0_13, %c512] : memref<2x1024xf32, #tpu.memory_space<vmem>>, vector<2x128xf32>
    %c0_14 = arith.constant 0 : index
    %c512_15 = arith.constant 512 : index
    %37 = vector.load %arg4[%c0_14, %c512_15] : memref<2x1024xf32, #tpu.memory_space<vmem>>, vector<2x128xf32>
    %38 = arith.mulf %36, %37 : vector<2x128xf32>
    %39 = arith.addf %31, %38 : vector<2x128xf32>
    %40 = arith.mulf %36, %36 : vector<2x128xf32>
    %41 = arith.mulf %37, %37 : vector<2x128xf32>
    %42 = arith.addf %40, %41 : vector<2x128xf32>
    %43 = arith.addf %35, %42 : vector<2x128xf32>
    %c0_16 = arith.constant 0 : index
    %c640 = arith.constant 640 : index
    %44 = vector.load %arg3[%c0_16, %c640] : memref<2x1024xf32, #tpu.memory_space<vmem>>, vector<2x128xf32>
    %c0_17 = arith.constant 0 : index
    %c640_18 = arith.constant 640 : index
    %45 = vector.load %arg4[%c0_17, %c640_18] : memref<2x1024xf32, #tpu.memory_space<vmem>>, vector<2x128xf32>
    %46 = arith.mulf %44, %45 : vector<2x128xf32>
    %47 = arith.addf %39, %46 : vector<2x128xf32>
    %48 = arith.mulf %44, %44 : vector<2x128xf32>
    %49 = arith.mulf %45, %45 : vector<2x128xf32>
    %50 = arith.addf %48, %49 : vector<2x128xf32>
    %51 = arith.addf %43, %50 : vector<2x128xf32>
    %c0_19 = arith.constant 0 : index
    %c768 = arith.constant 768 : index
    %52 = vector.load %arg3[%c0_19, %c768] : memref<2x1024xf32, #tpu.memory_space<vmem>>, vector<2x128xf32>
    %c0_20 = arith.constant 0 : index
    %c768_21 = arith.constant 768 : index
    %53 = vector.load %arg4[%c0_20, %c768_21] : memref<2x1024xf32, #tpu.memory_space<vmem>>, vector<2x128xf32>
    %54 = arith.mulf %52, %53 : vector<2x128xf32>
    %55 = arith.addf %47, %54 : vector<2x128xf32>
    %56 = arith.mulf %52, %52 : vector<2x128xf32>
    %57 = arith.mulf %53, %53 : vector<2x128xf32>
    %58 = arith.addf %56, %57 : vector<2x128xf32>
    %59 = arith.addf %51, %58 : vector<2x128xf32>
    %c0_22 = arith.constant 0 : index
    %c896 = arith.constant 896 : index
    %60 = vector.load %arg3[%c0_22, %c896] : memref<2x1024xf32, #tpu.memory_space<vmem>>, vector<2x128xf32>
    %c0_23 = arith.constant 0 : index
    %c896_24 = arith.constant 896 : index
    %61 = vector.load %arg4[%c0_23, %c896_24] : memref<2x1024xf32, #tpu.memory_space<vmem>>, vector<2x128xf32>
    %62 = arith.mulf %60, %61 : vector<2x128xf32>
    %63 = arith.addf %55, %62 : vector<2x128xf32>
    %64 = arith.mulf %60, %60 : vector<2x128xf32>
    %65 = arith.mulf %61, %61 : vector<2x128xf32>
    %66 = arith.addf %64, %65 : vector<2x128xf32>
    %67 = arith.addf %59, %66 : vector<2x128xf32>
    %c0_25 = arith.constant 0 : index
    %c0_26 = arith.constant 0 : index
    %68 = vector.load %arg7[%c0_25, %c0_26] : memref<2x128xf32, #tpu.memory_space<vmem>>, vector<2x128xf32>
    %69 = arith.addf %68, %63 : vector<2x128xf32>
    %c0_27 = arith.constant 0 : index
    %c0_28 = arith.constant 0 : index
    %70 = vector.load %arg7[%c0_27, %c0_28] : memref<2x128xf32, #tpu.memory_space<vmem>>, vector<2x128xf32>
    tpu.vector_store %arg7[%c0_27, %c0_28], %69 {strides = array<i32>} : memref<2x128xf32, #tpu.memory_space<vmem>>, vector<2x128xf32>,
    %c0_29 = arith.constant 0 : index
    %c0_30 = arith.constant 0 : index
    %71 = vector.load %arg8[%c0_29, %c0_30] : memref<2x128xf32, #tpu.memory_space<vmem>>, vector<2x128xf32>
    %72 = arith.addf %71, %67 : vector<2x128xf32>
    %c0_31 = arith.constant 0 : index
    %c0_32 = arith.constant 0 : index
    %73 = vector.load %arg8[%c0_31, %c0_32] : memref<2x128xf32, #tpu.memory_space<vmem>>, vector<2x128xf32>
    tpu.vector_store %arg8[%c0_31, %c0_32], %72 {strides = array<i32>} : memref<2x128xf32, #tpu.memory_space<vmem>>, vector<2x128xf32>,
    %c0_i32_33 = arith.constant 0 : i32
    %74 = arith.cmpi eq, %arg2, %c0_i32_33 : i32
    %75 = arith.extui %74 : i1 to i32
    %c0_i32_34 = arith.constant 0 : i32
    %76 = arith.cmpi ne, %75, %c0_i32_34 : i32
    scf.if %76 {
      %c0_35 = arith.constant 0 : index
      %c0_36 = arith.constant 0 : index
      %77 = vector.load %arg7[%c0_35, %c0_36] : memref<2x128xf32, #tpu.memory_space<vmem>>, vector<2x128xf32>
      %cst_37 = arith.constant dense<0.000000e+00> : vector<2xf32>
      %78 = vector.multi_reduction <add>, %77, %cst_37 [1] : vector<2x128xf32> to vector<2xf32>
      %79 = vector.shape_cast %78 : vector<2xf32> to vector<2x1xf32>
      %80 = vector.shape_cast %79 : vector<2x1xf32> to vector<1x2x1xf32>
      %c0_38 = arith.constant 0 : index
      %c0_39 = arith.constant 0 : index
      %c0_40 = arith.constant 0 : index
      %81 = vector.load %arg5[%c0_38, %c0_39, %c0_40] : memref<1x2x1xf32, #tpu.memory_space<vmem>>, vector<1x2x1xf32>
      tpu.vector_store %arg5[%c0_38, %c0_39, %c0_40], %80 {strides = array<i32>} : memref<1x2x1xf32, #tpu.memory_space<vmem>>, vector<1x2x1xf32>,
      %c0_41 = arith.constant 0 : index
      %c0_42 = arith.constant 0 : index
      %82 = vector.load %arg8[%c0_41, %c0_42] : memref<2x128xf32, #tpu.memory_space<vmem>>, vector<2x128xf32>
      %cst_43 = arith.constant dense<0.000000e+00> : vector<2xf32>
      %83 = vector.multi_reduction <add>, %82, %cst_43 [1] : vector<2x128xf32> to vector<2xf32>
      %84 = vector.shape_cast %83 : vector<2xf32> to vector<2x1xf32>
      %85 = vector.shape_cast %84 : vector<2x1xf32> to vector<1x2x1xf32>
      %c0_44 = arith.constant 0 : index
      %c0_45 = arith.constant 0 : index
      %c0_46 = arith.constant 0 : index
      %86 = vector.load %arg6[%c0_44, %c0_45, %c0_46] : memref<1x2x1xf32, #tpu.memory_space<vmem>>, vector<1x2x1xf32>
      tpu.vector_store %arg6[%c0_44, %c0_45, %c0_46], %85 {strides = array<i32>} : memref<1x2x1xf32, #tpu.memory_space<vmem>>, vector<1x2x1xf32>,
    } else {
    }
    return
  }
  func.func @transform_0(%arg0: i32, %arg1: i32, %arg2: i32) -> (i32, i32) {
    %c1_i32 = arith.constant 1 : i32
    %0 = arith.muli %arg0, %c1_i32 : i32
    %1 = arith.addi %0, %arg2 : i32
    %c0_i32 = arith.constant 0 : i32
    %2 = arith.minsi %1, %c0_i32 : i32
    %c0_i32_0 = arith.constant 0 : i32
    return %arg1, %2 : i32, i32
  }
  func.func @transform_1(%arg0: i32, %arg1: i32, %arg2: i32) -> (i32, i32) {
    %c1_i32 = arith.constant 1 : i32
    %0 = arith.muli %arg0, %c1_i32 : i32
    %1 = arith.addi %0, %arg2 : i32
    %c0_i32 = arith.constant 0 : i32
    %2 = arith.minsi %1, %c0_i32 : i32
    %c0_i32_0 = arith.constant 0 : i32
    return %arg1, %2 : i32, i32
  }
  func.func @transform_2(%arg0: i32, %arg1: i32, %arg2: i32) -> (i32, i32, i32) {
    %c0_i32 = arith.constant 0 : i32
    %c0_i32_0 = arith.constant 0 : i32
    return %arg0, %arg1, %c0_i32 : i32, i32, i32
  }
  func.func @transform_3(%arg0: i32, %arg1: i32, %arg2: i32) -> (i32, i32, i32) {
    %c0_i32 = arith.constant 0 : i32
    %c0_i32_0 = arith.constant 0 : i32
    return %arg0, %arg1, %c0_i32 : i32, i32, i32
  }
}

</mosaic_0001>

<llo_original>
// kernel: tpu_custom_call.1
$region0: #{tpu_custom_call.1}
  #allocation0 [shape = 'u32[]', space=smem, size = 0x4, offset = 0x4, fixed_abs, tag = 'smem constant byte address 0x4 - core index']
  #allocation1 [shape = 'u32[72,128]{1,0:T(1,128)}', space=vmem, size = 0x9000, scoped, tag = 'internal scratch']
  #allocation2 [shape = 'f32[2,128]{1,0:T(2,128)}', space=vmem, size = 0x400, scoped, tag = 'scratch operand']
  #allocation3 [shape = 'f32[2,128]{1,0:T(2,128)}', space=vmem, size = 0x400, scoped, tag = 'scratch operand']
  %s0 = inlined_call_operand.hbm [shape: f32[2,1024], index: 0, kind: input, shape index: {}]
  %s1 = inlined_call_operand.hbm [shape: f32[2,1024], index: 1, kind: input, shape index: {}]
  %s2 = inlined_call_operand.vmem [shape: f32[1,2,1], index: 2, kind: output, shape index: {0}]
  %s3 = inlined_call_operand.vmem [shape: f32[1,2,1], index: 3, kind: output, shape index: {1}]
  %4 = xla_tuple %s2, %s3
  %s5 = sld [smem:[#allocation0]]
  $region42: #{tpu_custom_call.1} parent=0
    _
  %s7 = ssub.s32 1, %s5
  %s8 = scalar_select 0, %s7, %s5
  $region1: #{tpu_custom_call.1} parent=0
    #allocation4 [shape = 'u8[8192]{0}', space=vmem, size = 0x2000, scoped, tag = 'input window, operand 0, single buffered']
    #allocation5 [shape = 's32[1]{0}', space=sflag, size = 0x4, scoped, tag = 'scoped memory for tpu_custom_call.1']
    #allocation6 [shape = 'u8[8192]{0}', space=vmem, size = 0x2000, scoped, tag = 'input window, operand 1, single buffered']
    #allocation7 [shape = 's32[1]{0}', space=sflag, size = 0x4, scoped, tag = 'scoped memory for tpu_custom_call.1']
    %9 = vsyncpa [#allocation5], 0
    %10 = vsyncpa [#allocation7], 0
    // Predicated region
    $region2: #{tpu_custom_call.1} parent=1 // pred_check
      _
    $region3: #{tpu_custom_call.1} parent=1 // pred_check_branch
      %12 = sbr.rel (0) target = $region5
    $region4: #{tpu_custom_call.1} parent=1 // pred_region
      %s13 = sadd.s32 0, 0
      %p14 = scmp.lt.s32.totalorder %s13, 0
      %s15 = scalar_select %p14, %s13, 0
      %s16 = smul.u32 8, %s15
      %18 = vsyncadd [#allocation5], 0
      %s19 = smul.addr %s16, 2
      %s20 = scalar_lea.hbm %s0, %s19
      %s22 = sshll.u32 %s20, 4
      %s23 = int_to_ptr.hbm [resolvable:$true] %s22
      %s24 = sshll.u32 [#allocation4], 4
      %s25 = int_to_ptr.vmem [resolvable:$true] %s24
      %27 = dma.hbm_to_vmem [thread:$0]  %s23, 256, %s25, [#allocation5]
    $region5: #{tpu_custom_call.1} parent=1 // pred_fallthru
      _
    // Predicated region
    $region6: #{tpu_custom_call.1} parent=1 // pred_check
      _
    $region7: #{tpu_custom_call.1} parent=1 // pred_check_branch
      %29 = sbr.rel (0) target = $region9
    $region8: #{tpu_custom_call.1} parent=1 // pred_region
      %s30 = sadd.s32 0, 0
      %p31 = scmp.lt.s32.totalorder %s30, 0
      %s32 = scalar_select %p31, %s30, 0
      %s33 = smul.u32 8, %s32
      %35 = vsyncadd [#allocation7], 0
      %s36 = smul.addr %s33, 2
      %s37 = scalar_lea.hbm %s1, %s36
      %s39 = sshll.u32 %s37, 4
      %s40 = int_to_ptr.hbm [resolvable:$true] %s39
      %s41 = sshll.u32 [#allocation6], 4
      %s42 = int_to_ptr.vmem [resolvable:$true] %s41
      %44 = dma.hbm_to_vmem [thread:$0]  %s40, 256, %s42, [#allocation7]
    $region9: #{tpu_custom_call.1} parent=1 // pred_fallthru
      _
    // Predicated region
    $region10: #{tpu_custom_call.1} parent=1 // pred_check
      _
    $region11: #{tpu_custom_call.1} parent=1 // pred_check_branch
      %46 = sbr.rel (0) target = $region13
    $region12: #{tpu_custom_call.1} parent=1 // pred_region
      %48 = dma.done [#allocation5], 256
    $region13: #{tpu_custom_call.1} parent=1 // pred_fallthru
      _
    // Predicated region
    $region14: #{tpu_custom_call.1} parent=1 // pred_check
      _
    $region15: #{tpu_custom_call.1} parent=1 // pred_check_branch
      %50 = sbr.rel (0) target = $region17
    $region16: #{tpu_custom_call.1} parent=1 // pred_region
      %52 = dma.done [#allocation7], 256
    $region17: #{tpu_custom_call.1} parent=1 // pred_fallthru
      _
    %s53 = sadd.s32 0, 0
    %p54 = scmp.lt.s32.totalorder %s53, 0
    %s55 = scalar_select %p54, %s53, 0
    %s56 = smul.u32 8, %s55
    %s57 = sadd.s32 0, 0
    %p58 = scmp.lt.s32.totalorder %s57, 0
    %s59 = scalar_select %p58, %s57, 0
    %s60 = smul.u32 8, %s59
    %p61 = scmp.eq.s32.totalorder 0, 0
    // Predicated region
    $region18: #{tpu_custom_call.1} parent=1 // pred_check
      %p62 = pneg %p61
    $region19: #{tpu_custom_call.1} parent=1 // pred_check_branch
      %64 = sbr.rel (%p62) target = $region21
    $region20: #{tpu_custom_call.1} parent=1 // pred_region
      %65 = vst [vmem:[#allocation2] sm:$0x3] 0.0
      %66 = vst [vmem:[#allocation3] sm:$0x3] 0.0
    $region21: #{tpu_custom_call.1} parent=1 // pred_fallthru
      _
    %v67 = vld [vmem:[#allocation4] sm:$0x3]
    %v68 = vld [vmem:[#allocation6] sm:$0x3]
    %v69 = vmul.f32 %v67, %v68
    %v70 = vadd.f32 %v69, 0.0
    %v71 = vmul.f32 %v67, %v67
    %v72 = vmul.f32 %v68, %v68
    %v73 = vadd.f32 %v71, %v72
    %v74 = vadd.f32 %v73, 0.0
    %v75 = vld [vmem:[#allocation4 + $0x2] sm:$0x3]
    %v76 = vld [vmem:[#allocation6 + $0x2] sm:$0x3]
    %v77 = vmul.f32 %v75, %v76
    %v78 = vadd.f32 %v70, %v77
    %v79 = vmul.f32 %v75, %v75
    %v80 = vmul.f32 %v76, %v76
    %v81 = vadd.f32 %v79, %v80
    %v82 = vadd.f32 %v74, %v81
    %v83 = vld [vmem:[#allocation4 + $0x4] sm:$0x3]
    %v84 = vld [vmem:[#allocation6 + $0x4] sm:$0x3]
    %v85 = vmul.f32 %v83, %v84
    %v86 = vadd.f32 %v78, %v85
    %v87 = vmul.f32 %v83, %v83
    %v88 = vmul.f32 %v84, %v84
    %v89 = vadd.f32 %v87, %v88
    %v90 = vadd.f32 %v82, %v89
    %v91 = vld [vmem:[#allocation4 + $0x6] sm:$0x3]
    %v92 = vld [vmem:[#allocation6 + $0x6] sm:$0x3]
    %v93 = vmul.f32 %v91, %v92
    %v94 = vadd.f32 %v86, %v93
    %v95 = vmul.f32 %v91, %v91
    %v96 = vmul.f32 %v92, %v92
    %v97 = vadd.f32 %v95, %v96
    %v98 = vadd.f32 %v90, %v97
    %v99 = vld [vmem:[#allocation4 + $0x8] sm:$0x3]
    %v100 = vld [vmem:[#allocation6 + $0x8] sm:$0x3]
    %v101 = vmul.f32 %v99, %v100
    %v102 = vadd.f32 %v94, %v101
    %v103 = vmul.f32 %v99, %v99
    %v104 = vmul.f32 %v100, %v100
    %v105 = vadd.f32 %v103, %v104
    %v106 = vadd.f32 %v98, %v105
    %v107 = vld [vmem:[#allocation4 + $0xa] sm:$0x3]
    %v108 = vld [vmem:[#allocation6 + $0xa] sm:$0x3]
    %v109 = vmul.f32 %v107, %v108
    %v110 = vadd.f32 %v102, %v109
    %v111 = vmul.f32 %v107, %v107
    %v112 = vmul.f32 %v108, %v108
    %v113 = vadd.f32 %v111, %v112
    %v114 = vadd.f32 %v106, %v113
    %v115 = vld [vmem:[#allocation4 + $0xc] sm:$0x3]
    %v116 = vld [vmem:[#allocation6 + $0xc] sm:$0x3]
    %v117 = vmul.f32 %v115, %v116
    %v118 = vadd.f32 %v110, %v117
    %v119 = vmul.f32 %v115, %v115
    %v120 = vmul.f32 %v116, %v116
    %v121 = vadd.f32 %v119, %v120
    %v122 = vadd.f32 %v114, %v121
    %v123 = vld [vmem:[#allocation4 + $0xe] sm:$0x3]
    %v124 = vld [vmem:[#allocation6 + $0xe] sm:$0x3]
    %v125 = vmul.f32 %v123, %v124
    %v126 = vadd.f32 %v118, %v125
    %v127 = vmul.f32 %v123, %v123
    %v128 = vmul.f32 %v124, %v124
    %v129 = vadd.f32 %v127, %v128
    %v130 = vadd.f32 %v122, %v129
    %v131 = vld [vmem:[#allocation2] sm:$0x3]
    %v132 = vadd.f32 %v131, %v126
    %133 = vst [vmem:[#allocation2] sm:$0x3] %v132
    %v134 = vld [vmem:[#allocation3] sm:$0x3]
    %v135 = vadd.f32 %v134, %v130
    %136 = vst [vmem:[#allocation3] sm:$0x3] %v135
    // Predicated region
    $region22: #{tpu_custom_call.1} parent=1 // pred_check
      %p137 = pneg %p61
    $region23: #{tpu_custom_call.1} parent=1 // pred_check_branch
      %139 = sbr.rel (%p137) target = $region25
    $region24: #{tpu_custom_call.1} parent=1 // pred_region
      %v140 = vld [vmem:[#allocation2] sm:$0x3]
      %vm141 = vcmask 1041408
      %v142 = vsel %vm141, %v140, 0.0
      %143 = vadd.xlane.f32.xlu0 %v142
      %v144 = vpop.xlane.xlu0 %143
      %vm145 = vcmask 1024
      %146 = vst.msk [vmem:[%s2] sm:$0x3] %vm145, %v144
      %v147 = vld [vmem:[#allocation3] sm:$0x3]
      %v148 = vsel %vm141, %v147, 0.0
      %149 = vadd.xlane.f32.xlu0 %v148
      %v150 = vpop.xlane.xlu0 %149
      %151 = vst.msk [vmem:[%s3] sm:$0x3] %vm145, %v150
    $region25: #{tpu_custom_call.1} parent=1 // pred_fallthru
      _
    // Predicated region
    $region26: #{tpu_custom_call.1} parent=1 // pred_check
      _
    $region27: #{tpu_custom_call.1} parent=1 // pred_check_branch
      %153 = sbr.rel (0) target = $region29
    $region28: #{tpu_custom_call.1} parent=1 // pred_region
      _
    $region29: #{tpu_custom_call.1} parent=1 // pred_fallthru
      _
    // Predicated region
    $region30: #{tpu_custom_call.1} parent=1 // pred_check
      _
    $region31: #{tpu_custom_call.1} parent=1 // pred_check_branch
      %155 = sbr.rel (0) target = $region33
    $region32: #{tpu_custom_call.1} parent=1 // pred_region
      _
    $region33: #{tpu_custom_call.1} parent=1 // pred_fallthru
      _
    // Predicated region
    $region34: #{tpu_custom_call.1} parent=1 // pred_check
      _
    $region35: #{tpu_custom_call.1} parent=1 // pred_check_branch
      %157 = sbr.rel (0) target = $region37
    $region36: #{tpu_custom_call.1} parent=1 // pred_region
      _
    $region37: #{tpu_custom_call.1} parent=1 // pred_fallthru
      _
    // Predicated region
    $region38: #{tpu_custom_call.1} parent=1 // pred_check
      _
    $region39: #{tpu_custom_call.1} parent=1 // pred_check_branch
      %159 = sbr.rel (0) target = $region41
    $region40: #{tpu_custom_call.1} parent=1 // pred_region
      _
    $region41: #{tpu_custom_call.1} parent=1 // pred_fallthru
      _
    %160 = vsyncpa [#allocation5], 1
    %161 = vsyncpa [#allocation7], 1

</llo_original>
